<compile_context>
chip_gen: v7x
topology: tpu7x:2x2x1
jax: 0.10.0
libtpu: 0.0.40
codegen_flags: <defaults>
</compile_context>

<pallas_src>
import numpy as np
import jax
import jax.numpy as jnp
from jax.experimental import pallas as pl
from jax.experimental.pallas import tpu as pltpu

_ALIGN = 128  # TPU lane width


def _round_up(n, m):
    return ((n + m - 1) // m) * m


# ---------------------------------------------------------------------------
# Parameter construction (plain-JAX glue) — mirrors the escnn module structure.
# ---------------------------------------------------------------------------
def so2_equiv_linear_params(key, c_in, l_in, c_out, l_out):
    """Dense (D_in, D_out) matrix of an SO(2)-equivariant enn.Linear + bias.

    Per frequency k>0 the equivariant maps between two copies of the freq-k
    irrep are spanned by {I, J} (complex multiplication, 2 params per channel
    pair); freq-0 blocks are arbitrary scalars; the bias acts on the freq-0
    (trivial irrep) components only.  Frequencies not shared by in/out map to 0.
    """
    d_in, d_out = 2 * l_in + 1, 2 * l_out + 1
    l_common = min(l_in, l_out)
    keys = jax.random.split(key, 2 + 2 * l_common)
    scale = 1.0 / np.sqrt(c_in * d_in)

    W = jnp.zeros((c_in, d_in, c_out, d_out), jnp.float32)
    # frequency-0 block: arbitrary c_in x c_out matrix
    w0 = scale * jax.random.normal(keys[0], (c_in, c_out), jnp.float32)
    W = W.at[:, 0, :, 0].set(w0)
    for k in range(1, l_common + 1):
        a = scale * jax.random.normal(keys[2 * k], (c_in, c_out), jnp.float32)
        b = scale * jax.random.normal(keys[2 * k + 1], (c_in, c_out), jnp.float32)
        ci, si = 2 * k - 1, 2 * k
        # y_cos = a*x_cos - b*x_sin ; y_sin = b*x_cos + a*x_sin
        W = W.at[:, ci, :, ci].set(a)
        W = W.at[:, si, :, ci].set(-b)
        W = W.at[:, ci, :, si].set(b)
        W = W.at[:, si, :, si].set(a)
    W = W.reshape(c_in * d_in, c_out * d_out)

    bias0 = scale * jax.random.normal(keys[1], (c_out,), jnp.float32)
    bias = jnp.zeros((c_out, d_out), jnp.float32).at[:, 0].set(bias0)
    bias = bias.reshape(1, c_out * d_out)
    return W, bias


def so2_fourier_matrices(c, lmax, n_grid):
    """Block-diagonal sampling (IFT) and Fourier-transform matrices of
    enn.FourierPointwise(type='regular', N=n_grid) for c fields of band-limit
    lmax.  A: (c*d, c*N) samples Fourier coefficients on the N-point SO(2)
    grid; Ainv: (c*N, c*d) transforms grid values back to coefficients."""
    d = 2 * lmax + 1
    theta = 2.0 * np.pi * np.arange(n_grid) / n_grid
    rows = [np.ones_like(theta)]
    for k in range(1, lmax + 1):
        rows.append(np.sqrt(2.0) * np.cos(k * theta))
        rows.append(np.sqrt(2.0) * np.sin(k * theta))
    A_blk = np.stack(rows, axis=0).astype(np.float32)        # (d, N)  sampling / IFT
    Ainv_blk = (A_blk.T / n_grid).astype(np.float32)          # (N, d)  FT back (A^T A = N I)
    eye = np.eye(c, dtype=np.float32)
    A = jnp.asarray(np.kron(eye, A_blk))                      # (c*d, c*N)
    Ainv = jnp.asarray(np.kron(eye, Ainv_blk))                # (c*N, c*d)
    return A, Ainv


def build_so2_mlp_params(key, c_in, l_in, channels, lmaxs, n_grid=8, act_out=True):
    params = []
    cur_c, cur_l = c_in, l_in
    for i, (c, l) in enumerate(zip(channels, lmaxs)):
        is_last = i == len(channels) - 1
        key, sub = jax.random.split(key)
        W, b = so2_equiv_linear_params(sub, cur_c, cur_l, c, l)
        if (not is_last) or act_out:
            A, Ainv = so2_fourier_matrices(c, l, n_grid)
            params.append(dict(W=W, b=b, A=A, Ainv=Ainv, act=True))
        else:
            params.append(dict(W=W, b=b, act=False))
        cur_c, cur_l = c, l
    return params


# ---------------------------------------------------------------------------
# Folding + padding glue: turn the layer list into fused matmul stages.
# ---------------------------------------------------------------------------
def build_fused_stages(params, align=_ALIGN, mxu_dtype=jnp.bfloat16,
                       min_dense_out=64):
    """Fold A into W (W@A) and Ainv into the next layer's W so hidden
    activations live in SO(2)-grid space; append a final bias-free projection
    (Ainv of the last activation) back to Fourier-coefficient space.

    Padding policy (all exact, zeros):
      * stage-0 rows stay at the true input width (so x needs NO padded copy),
      * intermediate column/row (contraction) dims are padded to 128 multiples
        inside the weight matrices -> lane-dense hidden activations,
      * the last stage keeps its natural output width when it is reasonably
        lane-dense (>= min_dense_out or already 128-aligned), so the kernel can
        store the exact result with no extra HBM slice pass afterwards.

    Returns (stages, out_dim) with stages = [(M, bias_or_None, apply_relu), ...].
    """
    raw = []
    pending_ainv = None
    for layer in params:
        W, b = layer["W"], layer["b"]
        if pending_ainv is not None:
            W = pending_ainv @ W        # previous FT folded into this Linear
            pending_ainv = None
        if layer["act"]:
            A, Ainv = layer["A"], layer["Ainv"]
            raw.append((W @ A, b @ A, True))     # Linear + sampling on SO(2) grid
            pending_ainv = Ainv
        else:
            raw.append((W, b, False))            # plain equivariant Linear
    if pending_ainv is not None:
        raw.append((pending_ainv, None, False))  # final FT: no bias, no ReLU

    out_dim = raw[-1][0].shape[1]
    out_cols = out_dim if (out_dim % align == 0 or out_dim >= min_dense_out) \
        else _round_up(out_dim, align)

    stages = []
    n_stages = len(raw)
    prev_cols = raw[0][0].shape[0]       # stage-0 contraction = true input width
    for s, (M, b, relu) in enumerate(raw):
        r, c = M.shape
        rp = prev_cols                                        # match incoming width
        cp = out_cols if s == n_stages - 1 else _round_up(c, align)
        Mp = jnp.zeros((rp, cp), jnp.float32).at[:r, :c].set(M).astype(mxu_dtype)
        bp = None if b is None else jnp.zeros((1, cp), jnp.float32).at[:, :c].set(b)
        stages.append((Mp, bp, relu))
        prev_cols = cp
    return stages, out_dim


# ---------------------------------------------------------------------------
# Fused Pallas kernel (hot path): whole MLP in one kernel body.
# ---------------------------------------------------------------------------
def _make_fused_mlp_kernel(stage_meta):
    """stage_meta: tuple of (has_bias, apply_relu) — static per-stage metadata."""

    def kernel(x_ref, *refs):
        # refs = (M_0, [b_0,] M_1, [b_1,] ..., o_ref)
        o_ref = refs[-1]
        h = x_ref[...]                                       # f32 activations
        idx = 0
        for has_bias, relu in stage_meta:                    # statically unrolled
            m_ref = refs[idx]
            idx += 1
            h = jnp.dot(h.astype(m_ref.dtype), m_ref[...],   # bf16 MXU operands
                        preferred_element_type=jnp.float32)  # f32 accumulation
            if has_bias:
                h = h + refs[idx][...]                       # f32 bias add (VPU)
                idx += 1
            if relu:
                h = jnp.maximum(h, 0.0)                      # FourierPointwise ReLU
        o_ref[...] = h.astype(o_ref.dtype)

    return kernel


def so2_mlp_forward(x, stages, out_dim, *, tb=512):
    """Run the fused SO2MLP forward.  x: (B, D_in) in coefficient layout."""
    B, d_in = x.shape
    assert d_in == stages[0][0].shape[0], "input width must match stage-0 rows"
    out_cols = stages[-1][0].shape[1]

    x = x.astype(jnp.float32)
    # Only pad the batch to a sublane multiple (<=7 rows, and only when needed);
    # feature dims are consumed/produced at their natural width (full-dim blocks),
    # so there is no wrapper-side HBM round-trip for padding/slicing wide buffers.
    B_eff = _round_up(B, 8)
    if B_eff != B:
        x = jnp.pad(x, ((0, B_eff - B), (0, 0)))
    tb_eff = min(_round_up(tb, 8), B_eff)     # big tile amortizes per-step overhead

    stage_meta = tuple((b is not None, bool(r)) for (_, b, r) in stages)
    kernel = _make_fused_mlp_kernel(stage_meta)

    operands = [x]
    in_specs = [pl.BlockSpec((tb_eff, d_in), lambda i: (i, 0))]
    for (M, b, _) in stages:
        operands.append(M)                    # bf16, resident (constant index_map)
        in_specs.append(pl.BlockSpec(M.shape, lambda i: (0, 0)))
        if b is not None:
            operands.append(b)                # f32 bias, resident
            in_specs.append(pl.BlockSpec(b.shape, lambda i: (0, 0)))

    out = pl.pallas_call(
        kernel,
        out_shape=jax.ShapeDtypeStruct((B_eff, out_cols), jnp.float32),
        grid=(pl.cdiv(B_eff, tb_eff),),       # boundary block masked by Pallas
        in_specs=in_specs,
        out_specs=pl.BlockSpec((tb_eff, out_cols), lambda i: (i, 0)),
        compiler_params=pltpu.CompilerParams(
            dimension_semantics=("parallel",),   # shard batch across TCs on v7x
        ),
    )(*operands)

    if B_eff != B or out_cols != out_dim:
        out = out[:B, :out_dim]
    return out


# ---------------------------------------------------------------------------
# Pure-JAX reference (un-folded math) for correctness checking.
# ---------------------------------------------------------------------------
def _ref_forward(x, params):
    h = x
    for p in params:
        h = h @ p["W"] + p["b"]
        if p["act"]:
            h = jnp.maximum(h @ p["A"], 0.0) @ p["Ainv"]
    return h


if __name__ == "__main__":
    key = jax.random.PRNGKey(0)
    kx, kp, kx2 = jax.random.split(key, 3)

    c_in, l_in = 8, 2                 # in_type: 8 fields, band-limit 2 -> 40 features
    channels, lmaxs, N = [16, 16], [2, 2], 8
    params = build_so2_mlp_params(kp, c_in, l_in, channels, lmaxs,
                                  n_grid=N, act_out=True)
    stages, out_dim = build_fused_stages(params)

    # small batch (spec-consistent shapes)
    B = 2
    x = jax.random.normal(kx, (B, c_in * (2 * l_in + 1)), jnp.float32)   # (2, 40)
    out = jax.block_until_ready(so2_mlp_forward(x, stages, out_dim))
    ref = jax.block_until_ready(_ref_forward(x, params))
    assert out.shape == (B, channels[-1] * (2 * lmaxs[-1] + 1)), out.shape
    # bf16 MXU operands with f32 accumulation -> loosened tolerance vs f32 reference
    np.testing.assert_allclose(np.asarray(out), np.asarray(ref), rtol=5e-2, atol=5e-2)

    # larger, non-8-aligned batch exercises batch padding and a bigger tile
    B2 = 260
    x2 = jax.random.normal(kx2, (B2, c_in * (2 * l_in + 1)), jnp.float32)
    out2 = jax.block_until_ready(so2_mlp_forward(x2, stages, out_dim))
    ref2 = jax.block_until_ready(_ref_forward(x2, params))
    assert out2.shape == (B2, channels[-1] * (2 * lmaxs[-1] + 1)), out2.shape
    np.testing.assert_allclose(np.asarray(out2), np.asarray(ref2), rtol=5e-2, atol=5e-2)

    print("KERNEL_OK")
</pallas_src>

<mosaic_0001>
module attributes {stable_mosaic.version = 11 : i64} {
  func.func @kernel(%arg0: i32, %arg1: memref<8x40xf32, #tpu.memory_space<vmem>>, %arg2: memref<40x128xbf16, #tpu.memory_space<vmem>>, %arg3: memref<1x128xf32, #tpu.memory_space<vmem>>, %arg4: memref<128x128xbf16, #tpu.memory_space<vmem>>, %arg5: memref<1x128xf32, #tpu.memory_space<vmem>>, %arg6: memref<128x80xbf16, #tpu.memory_space<vmem>>, %arg7: memref<8x80xf32, #tpu.memory_space<vmem>>) attributes {dimension_semantics = [#tpu.dimension_semantics<parallel>], iteration_bounds = array<i64: 1>, scalar_prefetch = 0 : i64, scratch_operands = 0 : i64, tpu.core_type = #tpu.core_type<tc>, window_params = [{transform_indices = @transform_0, window_bounds = array<i64: 8, 40>}, {pipeline_mode = #tpu.pipeline_mode<synchronous>, transform_indices = @transform_1, window_bounds = array<i64: 40, 128>}, {pipeline_mode = #tpu.pipeline_mode<synchronous>, transform_indices = @transform_2, window_bounds = array<i64: 1, 128>}, {pipeline_mode = #tpu.pipeline_mode<synchronous>, transform_indices = @transform_3, window_bounds = array<i64: 128, 128>}, {pipeline_mode = #tpu.pipeline_mode<synchronous>, transform_indices = @transform_4, window_bounds = array<i64: 1, 128>}, {pipeline_mode = #tpu.pipeline_mode<synchronous>, transform_indices = @transform_5, window_bounds = array<i64: 128, 80>}, {transform_indices = @transform_6, window_bounds = array<i64: 8, 80>}]} {
    %c0 = arith.constant 0 : index
    %c0_0 = arith.constant 0 : index
    %0 = vector.load %arg1[%c0, %c0_0] : memref<8x40xf32, #tpu.memory_space<vmem>>, vector<8x40xf32>
    %1 = arith.truncf %0 : vector<8x40xf32> to vector<8x40xbf16>
    %c0_1 = arith.constant 0 : index
    %c0_2 = arith.constant 0 : index
    %2 = vector.load %arg2[%c0_1, %c0_2] : memref<40x128xbf16, #tpu.memory_space<vmem>>, vector<40x128xbf16>
    %cst = arith.constant dense<0.000000e+00> : vector<8x128xf32>
    %3 = tpu.matmul %1, %2, %cst {dimension_numbers = #tpu.dot_dimension_numbers<[1], [0], [0], [1], [0, 0, 1, 1], [], []>} : vector<8x40xbf16>, vector<40x128xbf16>, vector<8x128xf32> -> vector<8x128xf32>
    %c0_3 = arith.constant 0 : index
    %c0_4 = arith.constant 0 : index
    %4 = vector.load %arg3[%c0_3, %c0_4] : memref<1x128xf32, #tpu.memory_space<vmem>>, vector<1x128xf32>
    %5 = vector.broadcast %4 : vector<1x128xf32> to vector<8x128xf32>
    %6 = arith.addf %3, %5 : vector<8x128xf32>
    %cst_5 = arith.constant 0.000000e+00 : f32
    %7 = vector.broadcast %cst_5 : f32 to vector<8x128xf32>
    %8 = arith.maximumf %6, %7 : vector<8x128xf32>
    %9 = arith.truncf %8 : vector<8x128xf32> to vector<8x128xbf16>
    %c0_6 = arith.constant 0 : index
    %c0_7 = arith.constant 0 : index
    %10 = vector.load %arg4[%c0_6, %c0_7] : memref<128x128xbf16, #tpu.memory_space<vmem>>, vector<128x128xbf16>
    %cst_8 = arith.constant dense<0.000000e+00> : vector<8x128xf32>
    %11 = tpu.matmul %9, %10, %cst_8 {dimension_numbers = #tpu.dot_dimension_numbers<[1], [0], [0], [1], [0, 0, 1, 1], [], []>} : vector<8x128xbf16>, vector<128x128xbf16>, vector<8x128xf32> -> vector<8x128xf32>
    %c0_9 = arith.constant 0 : index
    %c0_10 = arith.constant 0 : index
    %12 = vector.load %arg5[%c0_9, %c0_10] : memref<1x128xf32, #tpu.memory_space<vmem>>, vector<1x128xf32>
    %13 = vector.broadcast %12 : vector<1x128xf32> to vector<8x128xf32>
    %14 = arith.addf %11, %13 : vector<8x128xf32>
    %cst_11 = arith.constant 0.000000e+00 : f32
    %15 = vector.broadcast %cst_11 : f32 to vector<8x128xf32>
    %16 = arith.maximumf %14, %15 : vector<8x128xf32>
    %17 = arith.truncf %16 : vector<8x128xf32> to vector<8x128xbf16>
    %c0_12 = arith.constant 0 : index
    %c0_13 = arith.constant 0 : index
    %18 = vector.load %arg6[%c0_12, %c0_13] : memref<128x80xbf16, #tpu.memory_space<vmem>>, vector<128x80xbf16>
    %cst_14 = arith.constant dense<0.000000e+00> : vector<8x80xf32>
    %19 = tpu.matmul %17, %18, %cst_14 {dimension_numbers = #tpu.dot_dimension_numbers<[1], [0], [0], [1], [0, 0, 1, 1], [], []>} : vector<8x128xbf16>, vector<128x80xbf16>, vector<8x80xf32> -> vector<8x80xf32>
    %c0_15 = arith.constant 0 : index
    %c0_16 = arith.constant 0 : index
    %20 = vector.load %arg7[%c0_15, %c0_16] : memref<8x80xf32, #tpu.memory_space<vmem>>, vector<8x80xf32>
    tpu.vector_store %arg7[%c0_15, %c0_16], %19 {strides = array<i32>} : memref<8x80xf32, #tpu.memory_space<vmem>>, vector<8x80xf32>,
    return
  }
  func.func @transform_0(%arg0: i32) -> (i32, i32) {
    %c0_i32 = arith.constant 0 : i32
    %c0_i32_0 = arith.constant 0 : i32
    return %arg0, %c0_i32 : i32, i32
  }
  func.func @transform_1(%arg0: i32) -> (i32, i32) {
    %c0_i32 = arith.constant 0 : i32
    %c0_i32_0 = arith.constant 0 : i32
    %c0_i32_1 = arith.constant 0 : i32
    return %c0_i32, %c0_i32_0 : i32, i32
  }
  func.func @transform_2(%arg0: i32) -> (i32, i32) {
    %c0_i32 = arith.constant 0 : i32
    %c0_i32_0 = arith.constant 0 : i32
    %c0_i32_1 = arith.constant 0 : i32
    return %c0_i32, %c0_i32_0 : i32, i32
  }
  func.func @transform_3(%arg0: i32) -> (i32, i32) {
    %c0_i32 = arith.constant 0 : i32
    %c0_i32_0 = arith.constant 0 : i32
    %c0_i32_1 = arith.constant 0 : i32
    return %c0_i32, %c0_i32_0 : i32, i32
  }
  func.func @transform_4(%arg0: i32) -> (i32, i32) {
    %c0_i32 = arith.constant 0 : i32
    %c0_i32_0 = arith.constant 0 : i32
    %c0_i32_1 = arith.constant 0 : i32
    return %c0_i32, %c0_i32_0 : i32, i32
  }
  func.func @transform_5(%arg0: i32) -> (i32, i32) {
    %c0_i32 = arith.constant 0 : i32
    %c0_i32_0 = arith.constant 0 : i32
    %c0_i32_1 = arith.constant 0 : i32
    return %c0_i32, %c0_i32_0 : i32, i32
  }
  func.func @transform_6(%arg0: i32) -> (i32, i32) {
    %c0_i32 = arith.constant 0 : i32
    %c0_i32_0 = arith.constant 0 : i32
    return %arg0, %c0_i32 : i32, i32
  }
}

</mosaic_0001>

<llo_original>
// kernel: tpu_custom_call.1
$region0: #{tpu_custom_call.1}
  #allocation0 [shape = 'u32[]', space=smem, size = 0x4, offset = 0x4, fixed_abs, tag = 'smem constant byte address 0x4 - core index']
  #allocation1 [shape = 'u32[144,128]{1,0:T(1,128)}', space=vmem, size = 0x12000, scoped, tag = 'internal scratch']
  %s0 = inlined_call_operand.vmem [shape: f32[8,40], index: 0, kind: input, shape index: {}]
  %s1 = inlined_call_operand.vmem [shape: bf16[40,128], index: 1, kind: input, shape index: {}]
  %s2 = inlined_call_operand.vmem [shape: f32[1,128], index: 2, kind: input, shape index: {}]
  %s3 = inlined_call_operand.vmem [shape: bf16[128,128], index: 3, kind: input, shape index: {}]
  %s4 = inlined_call_operand.vmem [shape: f32[1,128], index: 4, kind: input, shape index: {}]
  %s5 = inlined_call_operand.vmem [shape: bf16[128,80], index: 5, kind: input, shape index: {}]
  %s6 = inlined_call_operand.hbm [shape: f32[8,80], index: 6, kind: output, shape index: {}]
  %s7 = sld [smem:[#allocation0]]
  $region34: #{tpu_custom_call.1} parent=0
    _
  %s9 = ssub.s32 1, %s7
  %s10 = scalar_select 0, %s9, %s7
  $region1: #{tpu_custom_call.1} parent=0
    #allocation2 [shape = 'u8[4096]{0}', space=vmem, size = 0x1000, scoped, tag = 'output window, operand 0, single buffered']
    #allocation3 [shape = 's32[1]{0}', space=sflag, size = 0x4, scoped, tag = 'scoped memory for tpu_custom_call.1']
    %11 = vsyncpa [#allocation3], 0
    // Predicated region
    $region2: #{tpu_custom_call.1} parent=1 // pred_check
      _
    $region3: #{tpu_custom_call.1} parent=1 // pred_check_branch
      %13 = sbr.rel (0) target = $region5
    $region4: #{tpu_custom_call.1} parent=1 // pred_region
      _
    $region5: #{tpu_custom_call.1} parent=1 // pred_fallthru
      _
    // Predicated region
    $region6: #{tpu_custom_call.1} parent=1 // pred_check
      _
    $region7: #{tpu_custom_call.1} parent=1 // pred_check_branch
      %15 = sbr.rel (0) target = $region9
    $region8: #{tpu_custom_call.1} parent=1 // pred_region
      _
    $region9: #{tpu_custom_call.1} parent=1 // pred_fallthru
      _
    // Predicated region
    $region10: #{tpu_custom_call.1} parent=1 // pred_check
      _
    $region11: #{tpu_custom_call.1} parent=1 // pred_check_branch
      %17 = sbr.rel (0) target = $region13
    $region12: #{tpu_custom_call.1} parent=1 // pred_region
      _
    $region13: #{tpu_custom_call.1} parent=1 // pred_fallthru
      _
    // Predicated region
    $region14: #{tpu_custom_call.1} parent=1 // pred_check
      _
    $region15: #{tpu_custom_call.1} parent=1 // pred_check_branch
      %19 = sbr.rel (0) target = $region17
    $region16: #{tpu_custom_call.1} parent=1 // pred_region
      _
    $region17: #{tpu_custom_call.1} parent=1 // pred_fallthru
      _
    // Predicated region
    $region18: #{tpu_custom_call.1} parent=1 // pred_check
      _
    $region19: #{tpu_custom_call.1} parent=1 // pred_check_branch
      %21 = sbr.rel (0) target = $region21
    $region20: #{tpu_custom_call.1} parent=1 // pred_region
      _
    $region21: #{tpu_custom_call.1} parent=1 // pred_fallthru
      _
    // Predicated region
    $region22: #{tpu_custom_call.1} parent=1 // pred_check
      _
    $region23: #{tpu_custom_call.1} parent=1 // pred_check_branch
      %23 = sbr.rel (0) target = $region25
    $region24: #{tpu_custom_call.1} parent=1 // pred_region
      _
    $region25: #{tpu_custom_call.1} parent=1 // pred_fallthru
      _
    %v25 = vld [vmem:[%s0] sm:$0xff]
    %v26 = vpack.c.bf16 %v25, %v25
    %v27 = vld [vmem:[%s1] sm:$0xf]
    %v28 = vld [vmem:[%s1 + $0x4] sm:$0xf]
    %v29 = vld [vmem:[%s1 + $0x8] sm:$0xf]
    %v30 = vld [vmem:[%s1 + $0xc] sm:$0xf]
    %v31 = vld [vmem:[%s1 + $0x10] sm:$0xf]
    %v32 = vld [vmem:[%s2] sm:$0x1]
    %v34 = vlaneseq
    %v35 = vshrl.u32 %v34, 7
    %v36 = vsub.s32 0, %v35
    %v37 = vrot.slane %v32, %v36
    %v44 = vunpack.c.l.b16 %v27
    %v45 = vunpack.c.l.b16 %v28
    %v46 = vunpack.c.l.b16 %v29
    %v47 = vunpack.c.l.b16 %v30
    %v48 = vunpack.c.l.b16 %v31
    %v49 = vpack.c.b16 %v45, %v44
    %v50 = vpack.c.b16 %v47, %v46
    %v51 = vpack.c.b16 %v48, %v48
    %vm54 = vcmask 326656
    %v56 = vsel %vm54, %v26, 0
    %vm58 = vcmask 1043456
    %v60 = vsel %vm58, %v51, 0
    %62 = vmatprep.subr.bf16.mxu0 0
    %63 = vmatpush1.bf16.msra.mxu0 %v49
    %64 = vmatprep.subr.bf16.mxu0 0
    %65 = vmatpush1.bf16.msra.mxu0 %v50
    %66 = vmatprep.subr.bf16.mxu0 0
    %67 = vmatpush1.bf16.msra.mxu0 %v60
    %68 = vmatprep.subr.bf16.mxu0 0
    %69 = vmatpush1.bf16.msra.mxu0 0
    %70 = vmatprep.subr.bf16.mxu0 0
    %71 = vmatpush1.bf16.msra.mxu0 0
    %72 = vmatprep.subr.bf16.mxu0 0
    %73 = vmatpush1.bf16.msra.mxu0 0
    %74 = vmatprep.subr.bf16.mxu0 0
    %75 = vmatpush1.bf16.msra.mxu0 0
    %76 = vmatprep.subr.bf16.mxu0 0
    %77 = vmatpush1.bf16.msra.mxu0 0
    %78 = vmatprep.subr.bf16.mxu0 0
    %79 = vmatpush1.bf16.msra.mxu0 0
    %80 = vmatprep.subr.bf16.mxu0 0
    %81 = vmatpush1.bf16.msra.mxu0 0
    %82 = vmatprep.subr.bf16.mxu0 0
    %83 = vmatpush1.bf16.msra.mxu0 0
    %84 = vmatprep.subr.bf16.mxu0 0
    %85 = vmatpush1.bf16.msra.mxu0 0
    %86 = vmatprep.subr.bf16.mxu0 0
    %87 = vmatpush1.bf16.msra.mxu0 0
    %88 = vmatprep.subr.bf16.mxu0 0
    %89 = vmatpush1.bf16.msra.mxu0 0
    %90 = vmatprep.subr.bf16.mxu0 0
    %91 = vmatpush1.bf16.msra.mxu0 0
    %92 = vmatprep.subr.bf16.mxu0 0
    %93 = vmatpush1.bf16.msra.mxu0 0
    %94 = vmatprep.mubr.bf16.mxu0 0
    %95 = vmatmul.mubr.bf16.gmra.mrb[0].mxu0 %v56
    %v96 = vpop.f32.mrb[0].mxu0
    %v97 = vadd.f32 %v37, %v96
    %v98 = vpop.f32.mrb[0].mxu0
    %v99 = vpop.f32.mrb[0].mxu0
    %v100 = vpop.f32.mrb[0].mxu0
    %101 = vdwg.mxu0
    %v102 = vmax.f32 %v97, 0.0
    %v103 = vpack.c.bf16 %v102, %v102
    %v104 = vld [vmem:[%s3] sm:$0xf]
    %v105 = vld [vmem:[%s3 + $0x4] sm:$0xf]
    %v106 = vld [vmem:[%s3 + $0x8] sm:$0xf]
    %v107 = vld [vmem:[%s3 + $0xc] sm:$0xf]
    %v108 = vld [vmem:[%s3 + $0x10] sm:$0xf]
    %v109 = vld [vmem:[%s3 + $0x14] sm:$0xf]
    %v110 = vld [vmem:[%s3 + $0x18] sm:$0xf]
    %v111 = vld [vmem:[%s3 + $0x1c] sm:$0xf]
    %v112 = vld [vmem:[%s3 + $0x20] sm:$0xf]
    %v113 = vld [vmem:[%s3 + $0x24] sm:$0xf]
    %v114 = vld [vmem:[%s3 + $0x28] sm:$0xf]
    %v115 = vld [vmem:[%s3 + $0x2c] sm:$0xf]
    %v116 = vld [vmem:[%s3 + $0x30] sm:$0xf]
    %v117 = vld [vmem:[%s3 + $0x34] sm:$0xf]
    %v118 = vld [vmem:[%s3 + $0x38] sm:$0xf]
    %v119 = vld [vmem:[%s3 + $0x3c] sm:$0xf]
    %v120 = vld [vmem:[%s4] sm:$0x1]
    %v122 = vlaneseq
    %v123 = vshrl.u32 %v122, 7
    %v124 = vsub.s32 0, %v123
    %v125 = vrot.slane %v120, %v124
    %v143 = vunpack.c.l.b16 %v104
    %v144 = vunpack.c.l.b16 %v105
    %v145 = vunpack.c.l.b16 %v106
    %v146 = vunpack.c.l.b16 %v107
    %v147 = vunpack.c.l.b16 %v108
    %v148 = vunpack.c.l.b16 %v109
    %v149 = vunpack.c.l.b16 %v110
    %v150 = vunpack.c.l.b16 %v111
    %v151 = vunpack.c.l.b16 %v112
    %v152 = vunpack.c.l.b16 %v113
    %v153 = vunpack.c.l.b16 %v114
    %v154 = vunpack.c.l.b16 %v115
    %v155 = vunpack.c.l.b16 %v116
    %v156 = vunpack.c.l.b16 %v117
    %v157 = vunpack.c.l.b16 %v118
    %v158 = vunpack.c.l.b16 %v119
    %v159 = vpack.c.b16 %v144, %v143
    %v160 = vpack.c.b16 %v146, %v145
    %v161 = vpack.c.b16 %v148, %v147
    %v162 = vpack.c.b16 %v150, %v149
    %v163 = vpack.c.b16 %v152, %v151
    %v164 = vpack.c.b16 %v154, %v153
    %v165 = vpack.c.b16 %v156, %v155
    %v166 = vpack.c.b16 %v158, %v157
    %175 = vmatprep.subr.bf16.mxu0 0
    %176 = vmatpush1.bf16.msra.mxu0 %v159
    %177 = vmatprep.subr.bf16.mxu0 0
    %178 = vmatpush1.bf16.msra.mxu0 %v160
    %179 = vmatprep.subr.bf16.mxu0 0
    %180 = vmatpush1.bf16.msra.mxu0 %v161
    %181 = vmatprep.subr.bf16.mxu0 0
    %182 = vmatpush1.bf16.msra.mxu0 %v162
    %183 = vmatprep.subr.bf16.mxu0 0
    %184 = vmatpush1.bf16.msra.mxu0 %v163
    %185 = vmatprep.subr.bf16.mxu0 0
    %186 = vmatpush1.bf16.msra.mxu0 %v164
    %187 = vmatprep.subr.bf16.mxu0 0
    %188 = vmatpush1.bf16.msra.mxu0 %v165
    %189 = vmatprep.subr.bf16.mxu0 0
    %190 = vmatpush1.bf16.msra.mxu0 %v166
    %191 = vmatprep.subr.bf16.mxu0 0
    %192 = vmatpush1.bf16.msra.mxu0 0
    %193 = vmatprep.subr.bf16.mxu0 0
    %194 = vmatpush1.bf16.msra.mxu0 0
    %195 = vmatprep.subr.bf16.mxu0 0
    %196 = vmatpush1.bf16.msra.mxu0 0
    %197 = vmatprep.subr.bf16.mxu0 0
    %198 = vmatpush1.bf16.msra.mxu0 0
    %199 = vmatprep.subr.bf16.mxu0 0
    %200 = vmatpush1.bf16.msra.mxu0 0
    %201 = vmatprep.subr.bf16.mxu0 0
    %202 = vmatpush1.bf16.msra.mxu0 0
    %203 = vmatprep.subr.bf16.mxu0 0
    %204 = vmatpush1.bf16.msra.mxu0 0
    %205 = vmatprep.subr.bf16.mxu0 0
    %206 = vmatpush1.bf16.msra.mxu0 0
    %207 = vmatprep.mubr.bf16.mxu0 0
    %208 = vmatmul.mubr.bf16.gmra.mrb[0].mxu0 %v103
    %v209 = vpop.f32.mrb[0].mxu0
    %v210 = vadd.f32 %v125, %v209
    %v211 = vpop.f32.mrb[0].mxu0
    %v212 = vpop.f32.mrb[0].mxu0
    %v213 = vpop.f32.mrb[0].mxu0
    %214 = vdwg.mxu0
    %v215 = vmax.f32 %v210, 0.0
    %v216 = vpack.c.bf16 %v215, %v215
    %v217 = vld [vmem:[%s5] sm:$0xf]
    %v218 = vld [vmem:[%s5 + $0x4] sm:$0xf]
    %v219 = vld [vmem:[%s5 + $0x8] sm:$0xf]
    %v220 = vld [vmem:[%s5 + $0xc] sm:$0xf]
    %v221 = vld [vmem:[%s5 + $0x10] sm:$0xf]
    %v222 = vld [vmem:[%s5 + $0x14] sm:$0xf]
    %v223 = vld [vmem:[%s5 + $0x18] sm:$0xf]
    %v224 = vld [vmem:[%s5 + $0x1c] sm:$0xf]
    %v225 = vld [vmem:[%s5 + $0x20] sm:$0xf]
    %v226 = vld [vmem:[%s5 + $0x24] sm:$0xf]
    %v227 = vld [vmem:[%s5 + $0x28] sm:$0xf]
    %v228 = vld [vmem:[%s5 + $0x2c] sm:$0xf]
    %v229 = vld [vmem:[%s5 + $0x30] sm:$0xf]
    %v230 = vld [vmem:[%s5 + $0x34] sm:$0xf]
    %v231 = vld [vmem:[%s5 + $0x38] sm:$0xf]
    %v232 = vld [vmem:[%s5 + $0x3c] sm:$0xf]
    %v249 = vunpack.c.l.b16 %v217
    %v250 = vunpack.c.l.b16 %v218
    %v251 = vunpack.c.l.b16 %v219
    %v252 = vunpack.c.l.b16 %v220
    %v253 = vunpack.c.l.b16 %v221
    %v254 = vunpack.c.l.b16 %v222
    %v255 = vunpack.c.l.b16 %v223
    %v256 = vunpack.c.l.b16 %v224
    %v257 = vunpack.c.l.b16 %v225
    %v258 = vunpack.c.l.b16 %v226
    %v259 = vunpack.c.l.b16 %v227
    %v260 = vunpack.c.l.b16 %v228
    %v261 = vunpack.c.l.b16 %v229
    %v262 = vunpack.c.l.b16 %v230
    %v263 = vunpack.c.l.b16 %v231
    %v264 = vunpack.c.l.b16 %v232
    %v265 = vpack.c.b16 %v250, %v249
    %v266 = vpack.c.b16 %v252, %v251
    %v267 = vpack.c.b16 %v254, %v253
    %v268 = vpack.c.b16 %v256, %v255
    %v269 = vpack.c.b16 %v258, %v257
    %v270 = vpack.c.b16 %v260, %v259
    %v271 = vpack.c.b16 %v262, %v261
    %v272 = vpack.c.b16 %v264, %v263
    %281 = vmatprep.subr.bf16.mxu0 0
    %282 = vmatpush1.bf16.msra.mxu0 %v265
    %283 = vmatprep.subr.bf16.mxu0 0
    %284 = vmatpush1.bf16.msra.mxu0 %v266
    %285 = vmatprep.subr.bf16.mxu0 0
    %286 = vmatpush1.bf16.msra.mxu0 %v267
    %287 = vmatprep.subr.bf16.mxu0 0
    %288 = vmatpush1.bf16.msra.mxu0 %v268
    %289 = vmatprep.subr.bf16.mxu0 0
    %290 = vmatpush1.bf16.msra.mxu0 %v269
    %291 = vmatprep.subr.bf16.mxu0 0
    %292 = vmatpush1.bf16.msra.mxu0 %v270
    %293 = vmatprep.subr.bf16.mxu0 0
    %294 = vmatpush1.bf16.msra.mxu0 %v271
    %295 = vmatprep.subr.bf16.mxu0 0
    %296 = vmatpush1.bf16.msra.mxu0 %v272
    %297 = vmatprep.subr.bf16.mxu0 0
    %298 = vmatpush1.bf16.msra.mxu0 0
    %299 = vmatprep.subr.bf16.mxu0 0
    %300 = vmatpush1.bf16.msra.mxu0 0
    %301 = vmatprep.subr.bf16.mxu0 0
    %302 = vmatpush1.bf16.msra.mxu0 0
    %303 = vmatprep.subr.bf16.mxu0 0
    %304 = vmatpush1.bf16.msra.mxu0 0
    %305 = vmatprep.subr.bf16.mxu0 0
    %306 = vmatpush1.bf16.msra.mxu0 0
    %307 = vmatprep.subr.bf16.mxu0 0
    %308 = vmatpush1.bf16.msra.mxu0 0
    %309 = vmatprep.subr.bf16.mxu0 0
    %310 = vmatpush1.bf16.msra.mxu0 0
    %311 = vmatprep.subr.bf16.mxu0 0
    %312 = vmatpush1.bf16.msra.mxu0 0
    %313 = vmatprep.mubr.bf16.mxu0 0
    %314 = vmatmul.mubr.bf16.gmra.mrb[0].mxu0 %v216
    %v315 = vpop.f32.mrb[0].mxu0
    %v316 = vadd.f32 0.0, %v315
    %v317 = vpop.f32.mrb[0].mxu0
    %v318 = vpop.f32.mrb[0].mxu0
    %v319 = vpop.f32.mrb[0].mxu0
    %320 = vdwg.mxu0
    %vm321 = vcmask 654336
    %322 = vst.msk [vmem:[#allocation2] sm:$0xff] %vm321, %v316
    // Predicated region
    $region26: #{tpu_custom_call.1} parent=1 // pred_check
      _
    $region27: #{tpu_custom_call.1} parent=1 // pred_check_branch
      %324 = sbr.rel (0) target = $region29
    $region28: #{tpu_custom_call.1} parent=1 // pred_region
      %s326 = ssub.s32 128, 128
      %327 = vsyncadd [#allocation3], %s326
      %s329 = sshll.u32 [#allocation2], 4
      %s330 = int_to_ptr.vmem [resolvable:$true] %s329
      %332 = dma.vmem_to_hbm [thread:$0]  %s330, 128, %s6, [#allocation3]
    $region29: #{tpu_custom_call.1} parent=1 // pred_fallthru
      _
    // Predicated region
    $region30: #{tpu_custom_call.1} parent=1 // pred_check
      _
    $region31: #{tpu_custom_call.1} parent=1 // pred_check_branch
      %334 = sbr.rel (0) target = $region33
    $region32: #{tpu_custom_call.1} parent=1 // pred_region
      %335 = dma.done [#allocation3], 128
    $region33: #{tpu_custom_call.1} parent=1 // pred_fallthru
      _
    %336 = vsyncpa [#allocation3], 1

</llo_original>
